<compile_context>
chip_gen: v6e
topology: v6e:2x2x1
jax: 0.10.0
libtpu: 0.0.40
codegen_flags: <defaults>
</compile_context>

<pallas_src>
import functools

import jax
import jax.numpy as jnp
from jax import random
from jax.experimental import pallas as pl
from jax.experimental.pallas import tpu as pltpu


# ---------------------------------------------------------------------------
# helpers
# ---------------------------------------------------------------------------
def _pick_batch_tile(B, T):
    """Pick a batch tile so each grid step sees a lane-dense (>=256, %128) block;
    fall back to the full batch (block == full array extent is always legal)."""
    for bt in range(1, B + 1):
        if B % bt == 0 and (bt * T) % 128 == 0 and bt * T >= 256:
            return bt
    return B


_COMPILER_PARAMS = pltpu.CompilerParams(
    dimension_semantics=("parallel",),          # batch-tile axis -> both TCs on v7x
    vmem_limit_bytes=32 * 1024 * 1024,          # safe on v5e/v6e (128 MiB) and v7x (64 MiB)
)


# ---------------------------------------------------------------------------
# Pallas kernels
# ---------------------------------------------------------------------------
def _cbcr_kernel(*args, F, c_feats, K, d, T, Bt, n_out, C_in, pad, has_down):
    """Fused _ConvBatchChompRelu dense layer.

    inputs : F dense feature refs, each (C_f, Bt*T) bf16
             w0 (n_out, K*C_in) bf16   stacked/folded stage-0 weights
             b0,a0 (n_out,1) f32       folded bias / PReLU slope
             w1 (n_out, K*n_out) bf16  stacked/folded stage-1 weights
             b1,a1 (n_out,1) f32
             [wd (n_out,C_in) bf16, bd (n_out,1) f32]   1x1 downsample (if C_in!=n_out)
             af (n_out,1) f32          final PReLU slope
    output : (n_out, Bt*T) bf16
    scratch: xpad0 (Bt,C_in,T+2*pad) bf16, slab0 (K*C_in,Bt*T) bf16,
             xpad1 (Bt,n_out,T+2*pad) bf16, slab1 (K*n_out,Bt*T) bf16
    """
    feats = args[:F]
    i = F
    w0, b0, a0, w1, b1, a1 = args[i:i + 6]
    i += 6
    if has_down:
        wd, bd = args[i:i + 2]
        i += 2
    af = args[i]
    o_ref = args[i + 1]
    xpad0, slab0, xpad1, slab1 = args[i + 2:i + 6]

    # ---- stage 0: gather dense-connected inputs into per-batch padded buffer ----
    xpad0[...] = jnp.zeros(xpad0.shape, xpad0.dtype)
    for b in range(Bt):
        row = 0
        for f in range(F):
            cf = c_feats[f]
            xpad0[b, row:row + cf, pad:pad + T] = feats[f][:, b * T:(b + 1) * T]
            row += cf
    # im2col slab -> one (n_out, K*C_in) x (K*C_in, Bt*T) MXU contraction
    for b in range(Bt):
        for j in range(K):
            slab0[j * C_in:(j + 1) * C_in, b * T:(b + 1) * T] = \
                xpad0[b, :, j * d:j * d + T]
    h0 = jnp.dot(w0[...], slab0[...], preferred_element_type=jnp.float32)
    h0 = h0 + b0[...]                                        # conv bias + BN folded
    out0 = jnp.where(h0 > 0, h0, a0[...] * h0).astype(jnp.bfloat16)   # PReLU
    # TODO(synk): nn.Dropout is the identity at inference; training-mode dropout omitted.

    # ---- stage 1 ----
    xpad1[...] = jnp.zeros(xpad1.shape, xpad1.dtype)
    for b in range(Bt):
        xpad1[b, :, pad:pad + T] = out0[:, b * T:(b + 1) * T]
    for b in range(Bt):
        for j in range(K):
            slab1[j * n_out:(j + 1) * n_out, b * T:(b + 1) * T] = \
                xpad1[b, :, j * d:j * d + T]
    h1 = jnp.dot(w1[...], slab1[...], preferred_element_type=jnp.float32)
    h1 = h1 + b1[...]
    out1 = jnp.where(h1 > 0, h1, a1[...] * h1)               # f32

    # ---- residual: centre tap of slab0 is exactly the unpadded input (K odd) ----
    jc = (K - 1) // 2
    x_flat = slab0[jc * C_in:(jc + 1) * C_in, :]
    if has_down:
        res = jnp.dot(wd[...], x_flat, preferred_element_type=jnp.float32) + bd[...]
    else:
        res = x_flat.astype(jnp.float32)
    v = out1 + res
    o_ref[...] = jnp.where(v > 0, v, af[...] * v).astype(o_ref.dtype)


def _transition_kernel(*args, F, c_feats, n_out):
    """_Transition: 1x1 Conv (no bias) + folded BN + PReLU over concatenated features."""
    feats = args[:F]
    w, b, a = args[F:F + 3]
    o_ref = args[F + 3]
    acc = jnp.zeros((n_out, o_ref.shape[1]), jnp.float32)
    off = 0
    for f in range(F):
        cf = c_feats[f]
        acc = acc + jnp.dot(w[:, off:off + cf], feats[f][...],
                            preferred_element_type=jnp.float32)
        off += cf
    acc = acc + b[...]
    o_ref[...] = jnp.where(acc > 0, acc, a[...] * acc).astype(o_ref.dtype)


def _norm_kernel(*args, F, c_feats):
    """Final BatchNorm1d (inference affine); also performs the channel 'concat' via
    channel-offset stores into a single lane-dense output."""
    feats = args[:F]
    scale, bias = args[F:F + 2]
    o_ref = args[F + 2]
    off = 0
    for f in range(F):
        cf = c_feats[f]
        v = feats[f][...].astype(jnp.float32)
        o_ref[off:off + cf, :] = v * scale[off:off + cf, :] + bias[off:off + cf, :]
        off += cf


# ---------------------------------------------------------------------------
# pallas_call wrappers (activations live as (C, B*T) bf16)
# ---------------------------------------------------------------------------
def cbcr_call(p, feats, c_feats, B, T):
    n_out, K, d = p['n_out'], p['K'], p['dilation']
    C_in = sum(c_feats)
    pad = (K - 1) * d // 2
    Tp = T + 2 * pad
    Bt = _pick_batch_tile(B, T)
    has_down = p['wd'] is not None
    F = len(feats)

    kern = functools.partial(_cbcr_kernel, F=F, c_feats=tuple(c_feats), K=K, d=d,
                             T=T, Bt=Bt, n_out=n_out, C_in=C_in, pad=pad,
                             has_down=has_down)

    params_in = [p['w0'], p['b0'], p['a0'], p['w1'], p['b1'], p['a1']]
    if has_down:
        params_in += [p['wd'], p['bd']]
    params_in += [p['af']]

    in_specs = ([pl.BlockSpec((c, Bt * T), lambda bt: (0, bt)) for c in c_feats]
                + [pl.BlockSpec(a.shape, lambda bt: (0, 0)) for a in params_in])

    return pl.pallas_call(
        kern,
        out_shape=jax.ShapeDtypeStruct((n_out, B * T), jnp.bfloat16),
        grid=(B // Bt,),
        in_specs=in_specs,
        out_specs=pl.BlockSpec((n_out, Bt * T), lambda bt: (0, bt)),
        scratch_shapes=[
            pltpu.VMEM((Bt, C_in, Tp), jnp.bfloat16),
            pltpu.VMEM((K * C_in, Bt * T), jnp.bfloat16),
            pltpu.VMEM((Bt, n_out, Tp), jnp.bfloat16),
            pltpu.VMEM((K * n_out, Bt * T), jnp.bfloat16),
        ],
        compiler_params=_COMPILER_PARAMS,
    )(*feats, *params_in)


def transition_call(p, feats, c_feats, B, T):
    n_out = p['w'].shape[0]
    Bt = _pick_batch_tile(B, T)
    F = len(feats)
    kern = functools.partial(_transition_kernel, F=F, c_feats=tuple(c_feats),
                             n_out=n_out)
    params_in = [p['w'], p['b'], p['a']]
    in_specs = ([pl.BlockSpec((c, Bt * T), lambda bt: (0, bt)) for c in c_feats]
                + [pl.BlockSpec(a.shape, lambda bt: (0, 0)) for a in params_in])
    return pl.pallas_call(
        kern,
        out_shape=jax.ShapeDtypeStruct((n_out, B * T), jnp.bfloat16),
        grid=(B // Bt,),
        in_specs=in_specs,
        out_specs=pl.BlockSpec((n_out, Bt * T), lambda bt: (0, bt)),
        compiler_params=_COMPILER_PARAMS,
    )(*feats, *params_in)


def norm_call(norm_params, feats, c_feats, B, T):
    scale, bias = norm_params
    C_total = sum(c_feats)
    Bt = _pick_batch_tile(B, T)
    F = len(feats)
    kern = functools.partial(_norm_kernel, F=F, c_feats=tuple(c_feats))
    in_specs = ([pl.BlockSpec((c, Bt * T), lambda bt: (0, bt)) for c in c_feats]
                + [pl.BlockSpec(scale.shape, lambda bt: (0, 0)),
                   pl.BlockSpec(bias.shape, lambda bt: (0, 0))])
    return pl.pallas_call(
        kern,
        out_shape=jax.ShapeDtypeStruct((C_total, B * T), jnp.float32),
        grid=(B // Bt,),
        in_specs=in_specs,
        out_specs=pl.BlockSpec((C_total, Bt * T), lambda bt: (0, bt)),
        compiler_params=_COMPILER_PARAMS,
    )(*feats, scale, bias)


# ---------------------------------------------------------------------------
# Parameter construction (deterministic, synthetic; BN/bias folded offline)
# ---------------------------------------------------------------------------
def _bn_fold(key, c):
    k1, k2, k3, k4 = random.split(key, 4)
    gamma = 1.0 + 0.1 * random.normal(k1, (c,), jnp.float32)
    beta = 0.1 * random.normal(k2, (c,), jnp.float32)
    mean = 0.1 * random.normal(k3, (c,), jnp.float32)
    var = 1.0 + 0.5 * random.uniform(k4, (c,), jnp.float32)
    scale = gamma / jnp.sqrt(var + 1e-5)
    return scale, beta - mean * scale


def _prelu_alpha(key, c):
    return jnp.full((c,), 0.25, jnp.float32) + 0.01 * random.normal(key, (c,), jnp.float32)


def _build_transition(key, c_in, c_out):
    """_Transition: Conv1d(1x1, bias=False) -> BN -> PReLU, BN folded into the weight."""
    k1, k2, k3 = random.split(key, 3)
    w = 0.1 * random.normal(k1, (c_out, c_in), jnp.float32)
    scale, bn_b = _bn_fold(k2, c_out)
    alpha = _prelu_alpha(k3, c_out)
    return dict(w=(w * scale[:, None]).astype(jnp.bfloat16),
                b=bn_b.reshape(c_out, 1),
                a=alpha.reshape(c_out, 1))


def _build_cbcr(key, n_in, n_out, kernel_size_set, dilation):
    """_ConvBatchChompRelu: both kernel-size branches of each conv stage are stacked
    (centered in a K_max tap grid) into one folded weight matrix per stage."""
    nk = len(kernel_size_set)
    assert n_out % nk == 0, "n_out must be divisible by number of kernels"
    nb = n_out // nk
    K = max(kernel_size_set)
    assert all(k % 2 == 1 for k in kernel_size_set), \
        "stacked-branch kernel assumes odd kernel sizes (DenseTCN uses 3/5/7)"
    for k in kernel_size_set:
        assert ((k - 1) * dilation) % 2 == 0, "symmetric chomp needs even (k-1)*dilation"

    def build_stage(key, c_in):
        W = jnp.zeros((n_out, K, c_in), jnp.float32)
        b = jnp.zeros((n_out,), jnp.float32)
        a = jnp.zeros((n_out,), jnp.float32)
        for br, k in enumerate(kernel_size_set):
            key, k1, k2, k3, k4 = random.split(key, 5)
            w_br = 0.1 * random.normal(k1, (nb, c_in, k), jnp.float32)   # Conv1d weight
            cb = 0.1 * random.normal(k2, (nb,), jnp.float32)             # Conv1d bias
            scale, bn_b = _bn_fold(k3, nb)
            alpha = _prelu_alpha(k4, nb)
            off = (K - k) // 2
            rows = slice(br * nb, (br + 1) * nb)
            W = W.at[rows, off:off + k, :].set(
                jnp.transpose(w_br, (0, 2, 1)) * scale[:, None, None])
            b = b.at[rows].set(cb * scale + bn_b)
            a = a.at[rows].set(alpha)
        return (W.reshape(n_out, K * c_in).astype(jnp.bfloat16),
                b.reshape(n_out, 1), a.reshape(n_out, 1))

    k0, k1, kd, kf = random.split(key, 4)
    w0, b0, a0 = build_stage(k0, n_in)
    w1, b1, a1 = build_stage(k1, n_out)
    if n_in != n_out:
        kd1, kd2 = random.split(kd)
        wd = (0.1 * random.normal(kd1, (n_out, n_in), jnp.float32)).astype(jnp.bfloat16)
        bd = (0.1 * random.normal(kd2, (n_out,), jnp.float32)).reshape(n_out, 1)
    else:
        wd, bd = None, None
    af = _prelu_alpha(kf, n_out).reshape(n_out, 1)
    return dict(w0=w0, b0=b0, a0=a0, w1=w1, b1=b1, a1=a1, wd=wd, bd=bd, af=af,
                n_out=n_out, K=K, dilation=dilation)


def build_dense_tcn(key, block_config, growth_rate_set, input_size, reduced_size,
                    kernel_size_set, dilation_size_set):
    params = {'reduced_size': reduced_size}
    key, k = random.split(key)
    params['transition0'] = _build_transition(k, input_size, reduced_size)
    num_features = reduced_size
    blocks, transitions = [], []
    for i, num_layers in enumerate(block_config):
        layers = []
        for li in range(num_layers):
            dil = dilation_size_set[li % len(dilation_size_set)]
            n_in = num_features + li * growth_rate_set[i]
            key, k = random.split(key)
            layers.append(_build_cbcr(k, n_in, growth_rate_set[i], kernel_size_set, dil))
        blocks.append(layers)
        num_features = num_features + num_layers * growth_rate_set[i]
        if i != len(block_config) - 1:
            key, k = random.split(key)
            transitions.append(_build_transition(k, num_features, reduced_size))
            num_features = reduced_size
    key, k = random.split(key)
    scale, bias = _bn_fold(k, num_features)
    params['blocks'] = blocks
    params['transitions'] = transitions
    params['norm5'] = (scale.reshape(num_features, 1), bias.reshape(num_features, 1))
    params['out_channels'] = num_features
    return params


# ---------------------------------------------------------------------------
# forward
# ---------------------------------------------------------------------------
def dense_tcn_forward(params, x):
    """x: (B, C_in, T) f32 -> (B, C_out, T) f32 (matches PyTorch NCL convention)."""
    B, C0, T = x.shape
    # one-time relayout to lane-packed (C, B*T) bf16 activations
    x2 = jnp.transpose(x, (1, 0, 2)).reshape(C0, B * T).astype(jnp.bfloat16)

    cur = transition_call(params['transition0'], [x2], [C0], B, T)
    num_features = params['reduced_size']
    nblocks = len(params['blocks'])
    final_feats, final_c = [cur], [num_features]
    for bi, layers in enumerate(params['blocks']):
        feats = [cur]
        c_list = [num_features]
        for lp in layers:
            new = cbcr_call(lp, feats, c_list, B, T)
            feats = feats + [new]
            c_list = c_list + [lp['n_out']]
        if bi != nblocks - 1:
            cur = transition_call(params['transitions'][bi], feats, c_list, B, T)
            num_features = params['reduced_size']
        else:
            final_feats, final_c = feats, c_list
    out2 = norm_call(params['norm5'], final_feats, final_c, B, T)   # (C_total, B*T) f32
    C_total = sum(final_c)
    return jnp.transpose(out2.reshape(C_total, B, T), (1, 0, 2))


# ---------------------------------------------------------------------------
if __name__ == "__main__":
    key = random.PRNGKey(0)
    kx, kp = random.split(key)

    # Small, DenseTCN-consistent config.
    B, C_in, T = 2, 16, 16
    block_config = (2, 2)
    growth_rate_set = (8, 8)
    reduced_size = 16
    kernel_size_set = (3, 5)       # odd sizes -> valid symmetric chomp & branch stacking
    dilation_size_set = (1, 2)

    x = random.normal(kx, (B, C_in, T), jnp.float32)
    params = build_dense_tcn(kp, block_config, growth_rate_set, C_in, reduced_size,
                             kernel_size_set, dilation_size_set)

    out = dense_tcn_forward(params, x)
    out = jax.block_until_ready(out)
    assert out.shape == (B, params['out_channels'], T), out.shape
    assert bool(jnp.all(jnp.isfinite(out)))
    print("KERNEL_OK")
</pallas_src>

<mosaic_0001>
module attributes {stable_mosaic.version = 11 : i64} {
  func.func @_transition_kernel(%arg0: i32, %arg1: memref<16x32xbf16, #tpu.memory_space<vmem>>, %arg2: memref<16x16xbf16, #tpu.memory_space<vmem>>, %arg3: memref<16x1xf32, #tpu.memory_space<vmem>>, %arg4: memref<16x1xf32, #tpu.memory_space<vmem>>, %arg5: memref<16x32xbf16, #tpu.memory_space<vmem>>) attributes {dimension_semantics = [#tpu.dimension_semantics<parallel>], iteration_bounds = array<i64: 1>, scalar_prefetch = 0 : i64, scratch_operands = 0 : i64, tpu.core_type = #tpu.core_type<tc>, window_params = [{transform_indices = @transform_0, window_bounds = array<i64: 16, 32>}, {pipeline_mode = #tpu.pipeline_mode<synchronous>, transform_indices = @transform_1, window_bounds = array<i64: 16, 16>}, {pipeline_mode = #tpu.pipeline_mode<synchronous>, transform_indices = @transform_2, window_bounds = array<i64: 16, 1>}, {pipeline_mode = #tpu.pipeline_mode<synchronous>, transform_indices = @transform_3, window_bounds = array<i64: 16, 1>}, {transform_indices = @transform_4, window_bounds = array<i64: 16, 32>}]} {
    %cst = arith.constant 0.000000e+00 : f32
    %0 = vector.broadcast %cst : f32 to vector<16x32xf32>
    %c0 = arith.constant 0 : index
    %c0_0 = arith.constant 0 : index
    %1 = vector.load %arg2[%c0, %c0_0] : memref<16x16xbf16, #tpu.memory_space<vmem>>, vector<16x16xbf16>
    %c0_1 = arith.constant 0 : index
    %c0_2 = arith.constant 0 : index
    %2 = vector.load %arg1[%c0_1, %c0_2] : memref<16x32xbf16, #tpu.memory_space<vmem>>, vector<16x32xbf16>
    %cst_3 = arith.constant dense<0.000000e+00> : vector<16x32xf32>
    %3 = tpu.matmul %1, %2, %cst_3 {dimension_numbers = #tpu.dot_dimension_numbers<[1], [0], [0], [1], [0, 0, 1, 1], [], []>} : vector<16x16xbf16>, vector<16x32xbf16>, vector<16x32xf32> -> vector<16x32xf32>
    %4 = arith.addf %0, %3 : vector<16x32xf32>
    %c0_4 = arith.constant 0 : index
    %c0_5 = arith.constant 0 : index
    %5 = vector.load %arg3[%c0_4, %c0_5] : memref<16x1xf32, #tpu.memory_space<vmem>>, vector<16x1xf32>
    %6 = vector.broadcast %5 : vector<16x1xf32> to vector<16x32xf32>
    %7 = arith.addf %4, %6 : vector<16x32xf32>
    %cst_6 = arith.constant 0.000000e+00 : f32
    %8 = vector.broadcast %cst_6 : f32 to vector<16x32xf32>
    %9 = arith.cmpf ogt, %7, %8 : vector<16x32xf32>
    %c0_7 = arith.constant 0 : index
    %c0_8 = arith.constant 0 : index
    %10 = vector.load %arg4[%c0_7, %c0_8] : memref<16x1xf32, #tpu.memory_space<vmem>>, vector<16x1xf32>
    %11 = vector.broadcast %10 : vector<16x1xf32> to vector<16x32xf32>
    %12 = arith.mulf %11, %7 : vector<16x32xf32>
    %13 = arith.select %9, %7, %12 : vector<16x32xi1>, vector<16x32xf32>
    %14 = arith.truncf %13 : vector<16x32xf32> to vector<16x32xbf16>
    %c0_9 = arith.constant 0 : index
    %c0_10 = arith.constant 0 : index
    %15 = vector.load %arg5[%c0_9, %c0_10] : memref<16x32xbf16, #tpu.memory_space<vmem>>, vector<16x32xbf16>
    tpu.vector_store %arg5[%c0_9, %c0_10], %14 {strides = array<i32>} : memref<16x32xbf16, #tpu.memory_space<vmem>>, vector<16x32xbf16>,
    return
  }
  func.func @transform_0(%arg0: i32) -> (i32, i32) {
    %c0_i32 = arith.constant 0 : i32
    %c0_i32_0 = arith.constant 0 : i32
    return %c0_i32, %arg0 : i32, i32
  }
  func.func @transform_1(%arg0: i32) -> (i32, i32) {
    %c0_i32 = arith.constant 0 : i32
    %c0_i32_0 = arith.constant 0 : i32
    %c0_i32_1 = arith.constant 0 : i32
    return %c0_i32, %c0_i32_0 : i32, i32
  }
  func.func @transform_2(%arg0: i32) -> (i32, i32) {
    %c0_i32 = arith.constant 0 : i32
    %c0_i32_0 = arith.constant 0 : i32
    %c0_i32_1 = arith.constant 0 : i32
    return %c0_i32, %c0_i32_0 : i32, i32
  }
  func.func @transform_3(%arg0: i32) -> (i32, i32) {
    %c0_i32 = arith.constant 0 : i32
    %c0_i32_0 = arith.constant 0 : i32
    %c0_i32_1 = arith.constant 0 : i32
    return %c0_i32, %c0_i32_0 : i32, i32
  }
  func.func @transform_4(%arg0: i32) -> (i32, i32) {
    %c0_i32 = arith.constant 0 : i32
    %c0_i32_0 = arith.constant 0 : i32
    return %c0_i32, %arg0 : i32, i32
  }
}

</mosaic_0001>

<llo_original>
// kernel: tpu_custom_call.1
$region0: #{tpu_custom_call.1}
  #allocation0 [shape = 'u32[]', space=smem, size = 0x4, offset = 0x4, fixed_abs, tag = 'smem constant byte address 0x4 - core index']
  #allocation1 [shape = 'u32[144,128]{1,0:T(1,128)}', space=vmem, size = 0x12000, scoped, tag = 'internal scratch']
  %s0 = inlined_call_operand.vmem [shape: bf16[16,32], index: 0, kind: input, shape index: {}]
  %s1 = inlined_call_operand.vmem [shape: bf16[16,16], index: 1, kind: input, shape index: {}]
  %s2 = inlined_call_operand.vmem [shape: f32[16,1], index: 2, kind: input, shape index: {}]
  %s3 = inlined_call_operand.vmem [shape: f32[16,1], index: 3, kind: input, shape index: {}]
  %s4 = inlined_call_operand.hbm [shape: bf16[16,32], index: 4, kind: output, shape index: {}]
  %s5 = sld [smem:[#allocation0]]
  $region26: #{tpu_custom_call.1} parent=0
    _
  %s7 = ssub.s32 1, %s5
  %s8 = scalar_select 0, %s7, %s5
  $region1: #{tpu_custom_call.1} parent=0
    #allocation2 [shape = 'u8[4096]{0}', space=vmem, size = 0x1000, scoped, tag = 'output window, operand 0, single buffered']
    #allocation3 [shape = 's32[1]{0}', space=sflag, size = 0x4, scoped, tag = 'scoped memory for tpu_custom_call.1']
    %9 = vsyncpa [#allocation3], 0
    // Predicated region
    $region2: #{tpu_custom_call.1} parent=1 // pred_check
      _
    $region3: #{tpu_custom_call.1} parent=1 // pred_check_branch
      %11 = sbr.rel (0) target = $region5
    $region4: #{tpu_custom_call.1} parent=1 // pred_region
      _
    $region5: #{tpu_custom_call.1} parent=1 // pred_fallthru
      _
    // Predicated region
    $region6: #{tpu_custom_call.1} parent=1 // pred_check
      _
    $region7: #{tpu_custom_call.1} parent=1 // pred_check_branch
      %13 = sbr.rel (0) target = $region9
    $region8: #{tpu_custom_call.1} parent=1 // pred_region
      _
    $region9: #{tpu_custom_call.1} parent=1 // pred_fallthru
      _
    // Predicated region
    $region10: #{tpu_custom_call.1} parent=1 // pred_check
      _
    $region11: #{tpu_custom_call.1} parent=1 // pred_check_branch
      %15 = sbr.rel (0) target = $region13
    $region12: #{tpu_custom_call.1} parent=1 // pred_region
      _
    $region13: #{tpu_custom_call.1} parent=1 // pred_fallthru
      _
    // Predicated region
    $region14: #{tpu_custom_call.1} parent=1 // pred_check
      _
    $region15: #{tpu_custom_call.1} parent=1 // pred_check_branch
      %17 = sbr.rel (0) target = $region17
    $region16: #{tpu_custom_call.1} parent=1 // pred_region
      _
    $region17: #{tpu_custom_call.1} parent=1 // pred_fallthru
      _
    %v19 = vld [vmem:[%s1] sm:$0xf]
    %v20 = vld [vmem:[%s1 + $0x4] sm:$0xf]
    %v21 = vld [vmem:[%s0] sm:$0xf]
    %v22 = vld [vmem:[%s0 + $0x4] sm:$0xf]
    %v23 = vld [vmem:[%s2] sm:$0xff]
    %v24 = vld [vmem:[%s2 + $0x8] sm:$0xff]
    %26 = vset.pattern.permute.xlu0 0
    %27 = vperm.xlu0 %26, %v23
    %v28 = vpop.permute.xlu0 %27
    %31 = vset.pattern.permute.xlu0 0
    %32 = vperm.xlu0 %31, %v24
    %v33 = vpop.permute.xlu0 %32
    %v37 = vunpack.c.l.b16 %v19
    %v38 = vunpack.c.l.b16 %v20
    %v39 = vpack.c.b16 %v38, %v37
    %v42 = vunpack.c.l.b16 %v21
    %v43 = vunpack.c.l.b16 %v22
    %v44 = vpack.c.b16 %v43, %v42
    %vm46 = vcmask 130048
    %v48 = vsel %vm46, %v39, 0
    %50 = vmatprep.subr.bf16.mxu0 0
    %51 = vmatpush1.bf16.msra.mxu0 0
    %52 = vmatprep.subr.bf16.mxu0 0
    %53 = vmatpush1.bf16.msra.mxu0 0
    %54 = vmatprep.subr.bf16.mxu0 0
    %55 = vmatpush1.bf16.msra.mxu0 0
    %56 = vmatprep.subr.bf16.mxu0 0
    %57 = vmatpush1.bf16.msra.mxu0 0
    %58 = vmatprep.subr.bf16.mxu0 0
    %59 = vmatpush1.bf16.msra.mxu0 0
    %60 = vmatprep.subr.bf16.mxu0 0
    %61 = vmatpush1.bf16.msra.mxu0 0
    %62 = vmatprep.subr.bf16.mxu0 0
    %63 = vmatpush1.bf16.msra.mxu0 0
    %64 = vmatprep.subr.bf16.mxu0 0
    %65 = vmatpush1.bf16.msra.mxu0 %v44
    %66 = vmatprep.subr.bf16.mxu0 0
    %67 = vmatpush2.bf16.msra.mxu0 0
    %68 = vmatprep.subr.bf16.mxu0 0
    %69 = vmatpush2.bf16.msra.mxu0 0
    %70 = vmatprep.subr.bf16.mxu0 0
    %71 = vmatpush2.bf16.msra.mxu0 0
    %72 = vmatprep.subr.bf16.mxu0 0
    %73 = vmatpush2.bf16.msra.mxu0 0
    %74 = vmatprep.subr.bf16.mxu0 0
    %75 = vmatpush2.bf16.msra.mxu0 0
    %76 = vmatprep.subr.bf16.mxu0 0
    %77 = vmatpush2.bf16.msra.mxu0 0
    %78 = vmatprep.subr.bf16.mxu0 0
    %79 = vmatpush2.bf16.msra.mxu0 0
    %80 = vmatprep.subr.bf16.mxu0 0
    %81 = vmatpush2.bf16.msra.mxu0 0
    %82 = vmatprep.mubr.bf16.mxu0 0
    %83 = vmatmul.mubr.bf16.gmra.mxu0 %v48
    %v84 = vpop.f32.mrf.mxu0
    %v85 = vadd.f32 %v28, %v84
    %v86 = vpop.f32.mrf.mxu0
    %v87 = vpop.f32.mrf.mxu0
    %v88 = vadd.f32 %v33, %v87
    %v89 = vpop.f32.mrf.mxu0
    %90 = vdwg.mxu0
    %vm91 = vcmp.gt.f32.partialorder %v85, 0.0
    %vm92 = vcmp.gt.f32.partialorder %v88, 0.0
    %v93 = vld [vmem:[%s3] sm:$0xff]
    %v94 = vld [vmem:[%s3 + $0x8] sm:$0xff]
    %96 = vset.pattern.permute.xlu0 0
    %97 = vperm.xlu0 %96, %v93
    %v98 = vpop.permute.xlu0 %97
    %101 = vset.pattern.permute.xlu0 0
    %102 = vperm.xlu0 %101, %v94
    %v103 = vpop.permute.xlu0 %102
    %v105 = vmul.f32 %v98, %v85
    %v106 = vmul.f32 %v103, %v88
    %v107 = vsel %vm91, %v85, %v105
    %v108 = vsel %vm92, %v88, %v106
    %v109 = vpack.c.bf16 %v108, %v107
    %v111 = vunpack.c.l.b16 %v109
    %v112 = vunpack.c.h.b16 %v109
    %v113 = vpack.c.b16 %v111, %v111
    %v114 = vpack.c.b16 %v112, %v112
    %vm117 = vcmask 257024
    %118 = vst.msk [vmem:[#allocation2] sm:$0xf] %vm117, %v113
    %119 = vst.msk [vmem:[#allocation2 + $0x4] sm:$0xf] %vm117, %v114
    // Predicated region
    $region18: #{tpu_custom_call.1} parent=1 // pred_check
      _
    $region19: #{tpu_custom_call.1} parent=1 // pred_check_branch
      %121 = sbr.rel (0) target = $region21
    $region20: #{tpu_custom_call.1} parent=1 // pred_region
      %s123 = ssub.s32 128, 128
      %124 = vsyncadd [#allocation3], %s123
      %s125 = sshll.u32 [#allocation2], 4
      %s126 = int_to_ptr.vmem [resolvable:$true] %s125
      %131 = dma.vmem_to_hbm [thread:$0]  %s126, 128, %s4, [#allocation3], 64, 64, 4
    $region21: #{tpu_custom_call.1} parent=1 // pred_fallthru
      _
    // Predicated region
    $region22: #{tpu_custom_call.1} parent=1 // pred_check
      _
    $region23: #{tpu_custom_call.1} parent=1 // pred_check_branch
      %133 = sbr.rel (0) target = $region25
    $region24: #{tpu_custom_call.1} parent=1 // pred_region
      %134 = dma.done [#allocation3], 128
    $region25: #{tpu_custom_call.1} parent=1 // pred_fallthru
      _
    %135 = vsyncpa [#allocation3], 1

</llo_original>
